<compile_context>
chip_gen: v7x
topology: tpu7x:2x2x1
jax: 0.10.0
libtpu: 0.0.40
codegen_flags: <defaults>
</compile_context>

<pallas_src>
import functools

import jax
import jax.numpy as jnp
from jax import lax
from jax.experimental import pallas as pl
from jax.experimental.pallas import tpu as pltpu


def _round_up(x, m):
    return (x + m - 1) // m * m


def _vmem_limit_bytes():
    """Generation-aware VMEM limit (half of physical, capped at 64 MiB)."""
    cap = None
    try:
        info = pltpu.get_tpu_info()
        for name in ("vmem_capacity_bytes", "vmem_size_bytes", "vmem_bytes"):
            v = getattr(info, name, None)
            if isinstance(v, int) and v > 0:
                cap = v
                break
    except Exception:
        cap = None
    if not cap:
        cap = 64 * 1024 * 1024          # conservative fallback: v7x per-TC physical
    return min(cap // 2, 64 * 1024 * 1024)


def _pick_block_n(N, C, itemsize, class_major, budget_bytes):
    """Largest sample-tile that keeps tiles + in-kernel f32 temps under budget."""
    Cl = _round_up(C, 128)              # lane-padded class count (C on the lane axis)
    Cs = _round_up(C, 8)                # sublane-padded class count (transposed temps)
    if class_major:
        # 2x double-buffered input tile + its lane-padded f32 cast
        # + ~5 class-major (C, bn) f32 temporaries + small per-sample vectors.
        per_row = 2 * Cl * itemsize + Cl * 4 + 5 * Cs * 4 + 64
        align, cap = 128, 32768
    else:
        # 2x double-buffered input tile + ~6 live full-tile f32 temporaries.
        per_row = 2 * Cl * itemsize + 6 * Cl * 4 + 64
        align, cap = max(8, 32 // itemsize), 4096
    bn_max = min(max(int(budget_bytes) // per_row, 1), cap)
    if N <= max(bn_max, align):
        return N                        # single full-dim block: no padding, no ragged edge
    return max(align, (bn_max // align) * align)


def _focal_loss_kernel(pred_ref, tgt_ref, w_ref, out_ref, *, gamma, class_major):
    """One sample-tile of focal loss.

    class_major: pred (bn, C) transposed in-kernel to (C, bn); tgt (1, bn);
                 w (C, 1); out (1, bn)  [lane-dense]
    row-major:   pred (bn, C); tgt (bn, 1); w (1, C); out (bn, 1)
    """
    x = pred_ref[...].astype(jnp.float32)            # (bn, C), promoted in VMEM
    if class_major:
        # Classes -> sublanes, samples -> the 128-wide lane axis.  The XLU
        # transpose is hidden under the input DMA and keeps the full-tile exp
        # and the reductions lane-dense for small C.
        x = jnp.transpose(x)                         # (C, bn)
        axis = 0
    else:
        axis = 1

    # Numerically stable softmax denominator — the ONLY full-tile transcendental.
    m = jnp.max(x, axis=axis, keepdims=True)
    shifted = x - m
    e = jnp.exp(shifted)
    s = jnp.sum(e, axis=axis, keepdims=True)

    # Single compare mask reused for both target-class reductions.
    cls = lax.broadcasted_iota(jnp.int32, x.shape, axis)
    is_t = cls == tgt_ref[...]
    shifted_t = jnp.sum(jnp.where(is_t, shifted, 0.0), axis=axis, keepdims=True)
    w_t = jnp.sum(jnp.where(is_t, w_ref[...], 0.0), axis=axis, keepdims=True)

    # Everything below is per-sample ((1, bn) / (bn, 1)) only.
    log_p_t = shifted_t - jnp.log(s)                 # log_softmax at the target class
    p_t = jnp.exp(log_p_t)                           # <= 1 by construction
    one_minus = jnp.maximum(1.0 - p_t, 0.0)          # guard pow() against -eps
    g = float(gamma)
    if g.is_integer() and g >= 0:
        mod = lax.integer_pow(one_minus, int(g))     # VALU-only multiplies
    else:
        mod = one_minus ** g                         # per-sample EUP only
    out_ref[...] = -(w_t * mod * log_p_t)


def focal_loss(prediction, target, weight=None, gamma=2.0, *, block_n=None):
    """prediction: (N, C) float logits; target: (N,) int labels -> loss (N,) float32."""
    N, C = prediction.shape
    if weight is None:
        weight = jnp.ones((C,), jnp.float32)
    w = jnp.asarray(weight, jnp.float32)
    tgt = jnp.asarray(target, jnp.int32)
    itemsize = jnp.dtype(prediction.dtype).itemsize

    # Small C only: class-major compute layout.  Mid/large C (even non-128
    # multiples like 1000) stays row-major: full-dim last block is legal and
    # nearly lane-dense already, and needs no transpose or class padding.
    class_major = C <= 64

    vmem_limit = _vmem_limit_bytes()
    bn = block_n if block_n is not None else _pick_block_n(
        N, C, itemsize, class_major, (vmem_limit * 3) // 4)
    grid = (pl.cdiv(N, bn),)

    kernel = functools.partial(_focal_loss_kernel, gamma=float(gamma),
                               class_major=class_major)

    if class_major:
        tgt_in = tgt.reshape(1, N)                   # free reshapes — no HBM copy
        w_in = w.reshape(C, 1)
        in_specs = [
            pl.BlockSpec((bn, C), lambda i: (i, 0)),  # logits: row-major HBM, no transpose
            pl.BlockSpec((1, bn), lambda i: (0, i)),  # targets
            pl.BlockSpec((C, 1), lambda i: (0, 0)),   # class weights (replicated)
        ]
        out_specs = pl.BlockSpec((1, bn), lambda i: (0, i))   # lane-dense output slab
        out_shape = jax.ShapeDtypeStruct((1, N), jnp.float32)
    else:
        tgt_in = tgt.reshape(N, 1)
        w_in = w.reshape(1, C)
        in_specs = [
            pl.BlockSpec((bn, C), lambda i: (i, 0)),
            pl.BlockSpec((bn, 1), lambda i: (i, 0)),
            pl.BlockSpec((1, C), lambda i: (0, 0)),
        ]
        # (bn, 1) output -> masked stores, but output bytes are tiny (minor per review).
        out_specs = pl.BlockSpec((bn, 1), lambda i: (i, 0))
        out_shape = jax.ShapeDtypeStruct((N, 1), jnp.float32)

    out = pl.pallas_call(
        kernel,
        out_shape=out_shape,
        grid_spec=pltpu.PrefetchScalarGridSpec(
            num_scalar_prefetch=0,
            grid=grid,
            in_specs=in_specs,
            out_specs=out_specs,
        ),
        compiler_params=pltpu.CompilerParams(
            dimension_semantics=("parallel",),
            vmem_limit_bytes=vmem_limit,
        ),
    )(prediction, tgt_in, w_in)
    return out.reshape(N)


def _focal_loss_ref(prediction, target, weight, gamma):
    # Pure-JAX reference mirroring the PyTorch module.
    log_prob = jax.nn.log_softmax(prediction.astype(jnp.float32), axis=-1)
    prob = jnp.exp(log_prob)
    mod = (1.0 - prob) ** gamma * log_prob
    picked = jnp.take_along_axis(mod, target[:, None], axis=-1)[:, 0]
    w_t = weight[target]
    return -w_t * picked


if __name__ == "__main__":
    key = jax.random.PRNGKey(0)
    k1, k2, k3, k4, k5, k6, k7, k8 = jax.random.split(key, 8)

    # Case 1: small class count -> class-major (in-kernel transpose) path.
    N1, C1 = 16, 8
    pred1 = jax.random.normal(k1, (N1, C1), jnp.float32)
    tgt1 = jax.random.randint(k2, (N1,), 0, C1, jnp.int32)
    w1 = jax.random.uniform(k3, (C1,), jnp.float32, 0.5, 1.5)
    loss1 = focal_loss(pred1, tgt1, weight=w1, gamma=2.0)
    jax.block_until_ready(loss1)
    ref1 = _focal_loss_ref(pred1, tgt1, w1, 2.0)
    assert loss1.shape == (N1,)
    assert jnp.allclose(loss1, ref1, atol=1e-5, rtol=1e-5), (loss1, ref1)

    # Case 2: larger class count -> row-major path, ragged N, no pad copy.
    N2, C2 = 12, 256
    pred2 = jax.random.normal(k4, (N2, C2), jnp.float32)
    tgt2 = jax.random.randint(k5, (N2,), 0, C2, jnp.int32)
    w2 = jax.random.uniform(k6, (C2,), jnp.float32, 0.5, 1.5)
    loss2 = focal_loss(pred2, tgt2, weight=w2, gamma=2.0)
    jax.block_until_ready(loss2)
    ref2 = _focal_loss_ref(pred2, tgt2, w2, 2.0)
    assert loss2.shape == (N2,)
    assert jnp.allclose(loss2, ref2, atol=1e-5, rtol=1e-5), (loss2, ref2)

    # Case 3: bf16 logits, default weight, non-integer gamma (per-sample pow path).
    N3, C3 = 300, 8
    pred3 = jax.random.normal(k7, (N3, C3), jnp.float32).astype(jnp.bfloat16)
    tgt3 = jax.random.randint(k8, (N3,), 0, C3, jnp.int32)
    loss3 = focal_loss(pred3, tgt3, weight=None, gamma=1.5)
    jax.block_until_ready(loss3)
    ref3 = _focal_loss_ref(pred3, tgt3, jnp.ones((C3,), jnp.float32), 1.5)
    assert loss3.shape == (N3,)
    assert jnp.allclose(loss3, ref3, atol=1e-4, rtol=1e-4), (loss3, ref3)

    print("KERNEL_OK")
</pallas_src>

<mosaic_0001>
module attributes {stable_mosaic.version = 11 : i64} {
  func.func @_focal_loss_kernel(%arg0: i32, %arg1: memref<16x8xf32, #tpu.memory_space<vmem>>, %arg2: memref<1x16xi32, #tpu.memory_space<vmem>>, %arg3: memref<8x1xf32, #tpu.memory_space<vmem>>, %arg4: memref<1x16xf32, #tpu.memory_space<vmem>>) attributes {dimension_semantics = [#tpu.dimension_semantics<parallel>], iteration_bounds = array<i64: 1>, scalar_prefetch = 0 : i64, scratch_operands = 0 : i64, tpu.core_type = #tpu.core_type<tc>, window_params = [{transform_indices = @transform_0, window_bounds = array<i64: 16, 8>}, {transform_indices = @transform_1, window_bounds = array<i64: 1, 16>}, {pipeline_mode = #tpu.pipeline_mode<synchronous>, transform_indices = @transform_2, window_bounds = array<i64: 8, 1>}, {transform_indices = @transform_3, window_bounds = array<i64: 1, 16>}]} {
    %c0 = arith.constant 0 : index
    %c0_0 = arith.constant 0 : index
    %0 = vector.load %arg1[%c0, %c0_0] : memref<16x8xf32, #tpu.memory_space<vmem>>, vector<16x8xf32>
    %1 = tpu.transpose %0, [1, 0] : vector<16x8xf32> -> vector<8x16xf32>
    %cst = arith.constant dense<0xFF800000> : vector<16xf32>
    %2 = vector.multi_reduction <maximumf>, %1, %cst [0] : vector<8x16xf32> to vector<16xf32>
    %3 = vector.shape_cast %2 : vector<16xf32> to vector<1x16xf32>
    %4 = vector.broadcast %3 : vector<1x16xf32> to vector<8x16xf32>
    %5 = arith.subf %1, %4 : vector<8x16xf32>
    %6 = math.exp %5 : vector<8x16xf32>
    %cst_1 = arith.constant dense<0.000000e+00> : vector<16xf32>
    %7 = vector.multi_reduction <add>, %6, %cst_1 [0] : vector<8x16xf32> to vector<16xf32>
    %8 = vector.shape_cast %7 : vector<16xf32> to vector<1x16xf32>
    %9 = tpu.iota {dimensions = array<i32: 0>} : vector<8x16xi32>
    %c0_2 = arith.constant 0 : index
    %c0_3 = arith.constant 0 : index
    %10 = vector.load %arg2[%c0_2, %c0_3] : memref<1x16xi32, #tpu.memory_space<vmem>>, vector<1x16xi32>
    %11 = vector.broadcast %10 : vector<1x16xi32> to vector<8x16xi32>
    %12 = arith.cmpi eq, %9, %11 : vector<8x16xi32>
    %cst_4 = arith.constant 0.000000e+00 : f32
    %13 = vector.broadcast %cst_4 : f32 to vector<8x16xf32>
    %14 = arith.select %12, %5, %13 : vector<8x16xi1>, vector<8x16xf32>
    %cst_5 = arith.constant dense<0.000000e+00> : vector<16xf32>
    %15 = vector.multi_reduction <add>, %14, %cst_5 [0] : vector<8x16xf32> to vector<16xf32>
    %16 = vector.shape_cast %15 : vector<16xf32> to vector<1x16xf32>
    %c0_6 = arith.constant 0 : index
    %c0_7 = arith.constant 0 : index
    %17 = vector.load %arg3[%c0_6, %c0_7] : memref<8x1xf32, #tpu.memory_space<vmem>>, vector<8x1xf32>
    %cst_8 = arith.constant 0.000000e+00 : f32
    %18 = vector.shape_cast %17 : vector<8x1xf32> to vector<8x1xf32>
    %19 = vector.broadcast %18 : vector<8x1xf32> to vector<8x16xf32>
    %20 = vector.broadcast %cst_8 : f32 to vector<8x16xf32>
    %21 = arith.select %12, %19, %20 : vector<8x16xi1>, vector<8x16xf32>
    %cst_9 = arith.constant dense<0.000000e+00> : vector<16xf32>
    %22 = vector.multi_reduction <add>, %21, %cst_9 [0] : vector<8x16xf32> to vector<16xf32>
    %23 = vector.shape_cast %22 : vector<16xf32> to vector<1x16xf32>
    %24 = math.log %8 : vector<1x16xf32>
    %25 = arith.subf %16, %24 : vector<1x16xf32>
    %26 = math.exp %25 : vector<1x16xf32>
    %cst_10 = arith.constant 1.000000e+00 : f32
    %27 = vector.broadcast %cst_10 : f32 to vector<1x16xf32>
    %28 = arith.subf %27, %26 : vector<1x16xf32>
    %cst_11 = arith.constant 0.000000e+00 : f32
    %29 = vector.broadcast %cst_11 : f32 to vector<1x16xf32>
    %30 = arith.maximumf %28, %29 : vector<1x16xf32>
    %31 = arith.mulf %30, %30 : vector<1x16xf32>
    %32 = arith.mulf %23, %31 : vector<1x16xf32>
    %33 = arith.mulf %32, %25 : vector<1x16xf32>
    %cst_12 = arith.constant 0.000000e+00 : f32
    %34 = vector.broadcast %cst_12 : f32 to vector<1x16xf32>
    %35 = arith.subf %34, %33 : vector<1x16xf32>
    %c0_13 = arith.constant 0 : index
    %c0_14 = arith.constant 0 : index
    %36 = vector.load %arg4[%c0_13, %c0_14] : memref<1x16xf32, #tpu.memory_space<vmem>>, vector<1x16xf32>
    tpu.vector_store %arg4[%c0_13, %c0_14], %35 {strides = array<i32>} : memref<1x16xf32, #tpu.memory_space<vmem>>, vector<1x16xf32>,
    return
  }
  func.func @transform_0(%arg0: i32) -> (i32, i32) {
    %c0_i32 = arith.constant 0 : i32
    %c0_i32_0 = arith.constant 0 : i32
    return %arg0, %c0_i32 : i32, i32
  }
  func.func @transform_1(%arg0: i32) -> (i32, i32) {
    %c0_i32 = arith.constant 0 : i32
    %c0_i32_0 = arith.constant 0 : i32
    return %c0_i32, %arg0 : i32, i32
  }
  func.func @transform_2(%arg0: i32) -> (i32, i32) {
    %c0_i32 = arith.constant 0 : i32
    %c0_i32_0 = arith.constant 0 : i32
    %c0_i32_1 = arith.constant 0 : i32
    return %c0_i32, %c0_i32_0 : i32, i32
  }
  func.func @transform_3(%arg0: i32) -> (i32, i32) {
    %c0_i32 = arith.constant 0 : i32
    %c0_i32_0 = arith.constant 0 : i32
    return %c0_i32, %arg0 : i32, i32
  }
}

</mosaic_0001>

<llo_original>
// kernel: tpu_custom_call.1
$region0: #{tpu_custom_call.1}
  #allocation0 [shape = 'u32[]', space=smem, size = 0x4, offset = 0x4, fixed_abs, tag = 'smem constant byte address 0x4 - core index']
  #allocation1 [shape = 'u32[144,128]{1,0:T(1,128)}', space=vmem, size = 0x12000, scoped, tag = 'internal scratch']
  %s0 = inlined_call_operand.vmem [shape: f32[16,8], index: 0, kind: input, shape index: {}]
  %s1 = inlined_call_operand.vmem [shape: s32[1,16], index: 1, kind: input, shape index: {}]
  %s2 = inlined_call_operand.vmem [shape: f32[8,1], index: 2, kind: input, shape index: {}]
  %s3 = inlined_call_operand.hbm [shape: f32[1,16], index: 3, kind: output, shape index: {}]
  %s4 = sld [smem:[#allocation0]]
  $region22: #{tpu_custom_call.1} parent=0
    _
  %s6 = ssub.s32 1, %s4
  %s7 = scalar_select 0, %s6, %s4
  $region1: #{tpu_custom_call.1} parent=0
    #allocation2 [shape = 'u8[512]{0}', space=vmem, size = 0x400, scoped, tag = 'output window, operand 0, single buffered']
    #allocation3 [shape = 's32[1]{0}', space=sflag, size = 0x4, scoped, tag = 'scoped memory for tpu_custom_call.1']
    %8 = vsyncpa [#allocation3], 0
    // Predicated region
    $region2: #{tpu_custom_call.1} parent=1 // pred_check
      _
    $region3: #{tpu_custom_call.1} parent=1 // pred_check_branch
      %10 = sbr.rel (0) target = $region5
    $region4: #{tpu_custom_call.1} parent=1 // pred_region
      _
    $region5: #{tpu_custom_call.1} parent=1 // pred_fallthru
      _
    // Predicated region
    $region6: #{tpu_custom_call.1} parent=1 // pred_check
      _
    $region7: #{tpu_custom_call.1} parent=1 // pred_check_branch
      %12 = sbr.rel (0) target = $region9
    $region8: #{tpu_custom_call.1} parent=1 // pred_region
      _
    $region9: #{tpu_custom_call.1} parent=1 // pred_fallthru
      _
    // Predicated region
    $region10: #{tpu_custom_call.1} parent=1 // pred_check
      _
    $region11: #{tpu_custom_call.1} parent=1 // pred_check_branch
      %14 = sbr.rel (0) target = $region13
    $region12: #{tpu_custom_call.1} parent=1 // pred_region
      _
    $region13: #{tpu_custom_call.1} parent=1 // pred_fallthru
      _
    %v15 = vld [vmem:[%s0] sm:$0xff]
    %v16 = vld [vmem:[%s0 + $0x8] sm:$0xff]
    %17 = vxpose.xlu0.b32.start [1/16] %v15, 128
    %18 = vxpose.xlu0.b32.cont [2/16] %v16, 128
    %19 = vxpose.xlu0.b32.cont [3/16] 0.0, 128
    %20 = vxpose.xlu0.b32.cont [4/16] 0.0, 128
    %21 = vxpose.xlu0.b32.cont [5/16] 0.0, 128
    %22 = vxpose.xlu0.b32.cont [6/16] 0.0, 128
    %23 = vxpose.xlu0.b32.cont [7/16] 0.0, 128
    %24 = vxpose.xlu0.b32.cont [8/16] 0.0, 128
    %25 = vxpose.xlu0.b32.cont [9/16] 0.0, 128
    %26 = vxpose.xlu0.b32.cont [10/16] 0.0, 128
    %27 = vxpose.xlu0.b32.cont [11/16] 0.0, 128
    %28 = vxpose.xlu0.b32.cont [12/16] 0.0, 128
    %29 = vxpose.xlu0.b32.cont [13/16] 0.0, 128
    %30 = vxpose.xlu0.b32.cont [14/16] 0.0, 128
    %31 = vxpose.xlu0.b32.cont [15/16] 0.0, 128
    %32 = vxpose.xlu0.b32.end [16/16] 0.0, 128
    %v33 = vpop.trf.xlu0
    %v34 = vpop.trf.xlu0
    %v35 = vpop.trf.xlu0
    %v36 = vpop.trf.xlu0
    %v37 = vpop.trf.xlu0
    %v38 = vpop.trf.xlu0
    %v39 = vpop.trf.xlu0
    %v40 = vpop.trf.xlu0
    %v41 = vpop.trf.xlu0
    %v42 = vpop.trf.xlu0
    %v43 = vpop.trf.xlu0
    %v44 = vpop.trf.xlu0
    %v45 = vpop.trf.xlu0
    %v46 = vpop.trf.xlu0
    %v47 = vpop.trf.xlu0
    %v48 = vpop.trf.xlu0
    %vm49 = vcmask 130048
    %v50 = vsel %vm49, %v33, -inf
    %v51 = vrot.slane %v50, 4
    %v52 = vmax.f32 %v50, %v51
    %v53 = vrot.slane %v52, 2
    %v54 = vmax.f32 %v52, %v53
    %v55 = vrot.slane %v54, 1
    %v56 = vmax.f32 %v54, %v55
    %v57 = vsub.f32 %v33, %v56
    %v58 = vmul.f32 %v57, 1.442695
    %v59 = vpow.pop %v58
    %v60 = vsel %vm49, %v59, 0.0
    %v61 = vrot.slane %v60, 4
    %v62 = vadd.f32 %v60, %v61
    %v63 = vrot.slane %v62, 2
    %v64 = vadd.f32 %v62, %v63
    %v65 = vrot.slane %v64, 1
    %v66 = vadd.f32 %v64, %v65
    %v67 = vlaneseq
    %v68 = vshrl.u32 %v67, 7
    %v69 = vld [vmem:[%s1] sm:$0x1]
    %v70 = vlaneseq
    %v71 = vshrl.u32 %v70, 7
    %v72 = vsub.s32 0, %v71
    %v73 = vrot.slane %v69, %v72
    %vm74 = vcmp.eq.s32.totalorder %v68, %v73
    %v75 = vsel %vm74, %v57, 0.0
    %v76 = vsel %vm49, %v75, 0.0
    %v77 = vrot.slane %v76, 4
    %v78 = vadd.f32 %v76, %v77
    %v79 = vrot.slane %v78, 2
    %v80 = vadd.f32 %v78, %v79
    %v81 = vrot.slane %v80, 1
    %v82 = vadd.f32 %v80, %v81
    %v83 = vld [vmem:[%s2] sm:$0xff]
    %85 = vset.pattern.permute.xlu0 0
    %86 = vperm.xlu0 %85, %v83
    %v87 = vpop.permute.xlu0 %86
    %v89 = vsel %vm74, %v87, 0.0
    %v90 = vsel %vm49, %v89, 0.0
    %v91 = vrot.slane %v90, 4
    %v92 = vadd.f32 %v90, %v91
    %v93 = vrot.slane %v92, 2
    %v94 = vadd.f32 %v92, %v93
    %v95 = vrot.slane %v94, 1
    %v96 = vadd.f32 %v94, %v95
    %v97 = vlog2.pop %v66
    %v98 = vmul.f32 %v97, 0.6931472
    %v99 = vsub.f32 %v82, %v98
    %v100 = vmul.f32 %v99, 1.442695
    %v101 = vpow.pop %v100
    %v102 = vsub.f32 1.0, %v101
    %v103 = vmax.f32 %v102, 0.0
    %v104 = vmul.f32 %v103, %v103
    %v105 = vmul.f32 %v96, %v104
    %v106 = vmul.f32 %v105, %v99
    %v107 = vsub.f32 0.0, %v106
    %vm108 = vcmask 122880
    %109 = vst.msk [vmem:[#allocation2] sm:$0x1] %vm108, %v107
    // Predicated region
    $region14: #{tpu_custom_call.1} parent=1 // pred_check
      _
    $region15: #{tpu_custom_call.1} parent=1 // pred_check_branch
      %111 = sbr.rel (0) target = $region17
    $region16: #{tpu_custom_call.1} parent=1 // pred_region
      %s113 = ssub.s32 16, 16
      %114 = vsyncadd [#allocation3], %s113
      %s116 = sshll.u32 [#allocation2], 4
      %s117 = int_to_ptr.vmem [resolvable:$true] %s116
      %119 = dma.vmem_to_hbm [thread:$0]  %s117, 16, %s3, [#allocation3]
    $region17: #{tpu_custom_call.1} parent=1 // pred_fallthru
      _
    // Predicated region
    $region18: #{tpu_custom_call.1} parent=1 // pred_check
      _
    $region19: #{tpu_custom_call.1} parent=1 // pred_check_branch
      %121 = sbr.rel (0) target = $region21
    $region20: #{tpu_custom_call.1} parent=1 // pred_region
      %122 = dma.done [#allocation3], 16
    $region21: #{tpu_custom_call.1} parent=1 // pred_fallthru
      _
    %123 = vsyncpa [#allocation3], 1

</llo_original>
